<compile_context>
chip_gen: v7x
topology: tpu7x:2x2x1
jax: 0.10.0
libtpu: 0.0.40
codegen_flags: <defaults>
</compile_context>

<pallas_src>
import functools

import jax
import jax.numpy as jnp
from jax import lax
from jax.experimental import pallas as pl
from jax.experimental.pallas import tpu as pltpu

LANE = 128  # lane width; output feature dim is padded to a multiple of this


def _round_up(n, m):
    return ((n + m - 1) // m) * m


def _choose_tile(batch, block_b):
    """Pick (tb, padded_batch). At least 2 grid steps when batch >= 16 so both
    v7x TensorCores get work; tb adapts to the batch to keep padding < 8 rows."""
    min_tiles = 2 if batch >= 16 else 1
    n_tiles = max(min_tiles, pl.cdiv(batch, block_b))
    tb = _round_up(pl.cdiv(batch, n_tiles), 8)          # f32 sublane multiple
    bp = _round_up(batch, tb)
    return tb, bp


def _dqn_specs(tb, n_obs, hidden, lane_pad):
    """Input BlockSpecs: x streamed over the batch, weights/biases resident."""
    resident = lambda i: (0, 0)  # same block every step -> stays in VMEM
    return [
        pl.BlockSpec((tb, n_obs), lambda i: (i, 0)),      # x
        pl.BlockSpec((n_obs, hidden), resident),          # w1
        pl.BlockSpec((1, hidden), resident),              # b1
        pl.BlockSpec((hidden, hidden), resident),         # w2
        pl.BlockSpec((1, hidden), resident),              # b2
        pl.BlockSpec((hidden, lane_pad), resident),       # w3 (pre-padded)
        pl.BlockSpec((1, lane_pad), resident),            # b3 (pre-padded)
    ]


def _mlp(x, w1, b1, w2, b2, w3, b3):
    h1 = jnp.maximum(
        jnp.dot(x, w1, preferred_element_type=jnp.float32) + b1, 0.0)
    h2 = jnp.maximum(
        jnp.dot(h1, w2, preferred_element_type=jnp.float32) + b2, 0.0)
    return jnp.dot(h2, w3, preferred_element_type=jnp.float32) + b3


def dqn_q_kernel(x_ref, w1_ref, b1_ref, w2_ref, b2_ref, w3_ref, b3_ref, out_ref):
    q = _mlp(x_ref[...], w1_ref[...], b1_ref[...], w2_ref[...], b2_ref[...],
             w3_ref[...], b3_ref[...])
    out_ref[...] = q.astype(out_ref.dtype)


def dqn_act_kernel(x_ref, w1_ref, b1_ref, w2_ref, b2_ref, w3_ref, b3_ref,
                   a_ref, *, n_actions):
    # Fused greedy policy: argmax over the real action columns, in-kernel.
    q = _mlp(x_ref[...], w1_ref[...], b1_ref[...], w2_ref[...], b2_ref[...],
             w3_ref[...], b3_ref[...])
    lane_pad = q.shape[-1]
    col = lax.broadcasted_iota(jnp.int32, q.shape, 1)
    qm = jnp.where(col < n_actions, q, jnp.finfo(jnp.float32).min)
    qmax = jnp.max(qm, axis=-1, keepdims=True)
    # first index achieving the max (matches jnp.argmax tie-break)
    first = jnp.min(jnp.where(qm == qmax, col, lane_pad), axis=-1, keepdims=True)
    a_ref[...] = first.astype(jnp.int32)


def dqn_forward(x, params, *, n_actions, block_b=1024):
    """Exact DQN.forward: x [B, n_obs] f32 -> Q-values [B, n_actions] f32."""
    w1, b1, w2, b2, w3, b3 = (params["w1"], params["b1"], params["w2"],
                              params["b2"], params["w3"], params["b3"])
    B, n_obs = x.shape
    hidden = w1.shape[1]
    lane_pad = w3.shape[1]  # pre-padded multiple of LANE (done at init time)

    tb, bp = _choose_tile(B, block_b)
    if bp != B:
        x = jnp.pad(x, ((0, bp - B), (0, 0)))

    out = pl.pallas_call(
        dqn_q_kernel,
        out_shape=jax.ShapeDtypeStruct((bp, lane_pad), jnp.float32),
        grid=(bp // tb,),
        in_specs=_dqn_specs(tb, n_obs, hidden, lane_pad),
        out_specs=pl.BlockSpec((tb, lane_pad), lambda i: (i, 0)),
        compiler_params=pltpu.CompilerParams(
            dimension_semantics=("parallel",)),   # batch axis shardable on v7x
    )(x, w1, b1, w2, b2, w3, b3)

    # Training/TD path keeps the module's return contract. Acting path should
    # use dqn_act below, which fuses the argmax and skips this slab + slice.
    return out[:B, :n_actions]


def dqn_act(x, params, *, n_actions, block_b=1024):
    """Fused forward + greedy argmax: x [B, n_obs] -> actions [B] int32."""
    w1, b1, w2, b2, w3, b3 = (params["w1"], params["b1"], params["w2"],
                              params["b2"], params["w3"], params["b3"])
    B, n_obs = x.shape
    hidden = w1.shape[1]
    lane_pad = w3.shape[1]

    tb, bp = _choose_tile(B, block_b)
    if bp != B:
        x = jnp.pad(x, ((0, bp - B), (0, 0)))

    out = pl.pallas_call(
        functools.partial(dqn_act_kernel, n_actions=n_actions),
        out_shape=jax.ShapeDtypeStruct((bp, 1), jnp.int32),
        grid=(bp // tb,),
        in_specs=_dqn_specs(tb, n_obs, hidden, lane_pad),
        out_specs=pl.BlockSpec((tb, 1), lambda i: (i, 0)),
        compiler_params=pltpu.CompilerParams(
            dimension_semantics=("parallel",)),
    )(x, w1, b1, w2, b2, w3, b3)

    return out[:B, 0]


def init_dqn_params(key, n_observations, n_actions, hidden=64):
    """PyTorch-nn.Linear-style init (uniform +/- 1/sqrt(fan_in)). Weights are
    stored [in, out]; the output projection is pre-padded lane-dense so the
    hot forward path has no per-call padding ops."""
    ks = jax.random.split(key, 6)

    def linear(kw, kb, fan_in, fan_out):
        bound = 1.0 / jnp.sqrt(jnp.float32(fan_in))
        w = jax.random.uniform(kw, (fan_in, fan_out), jnp.float32, -bound, bound)
        b = jax.random.uniform(kb, (1, fan_out), jnp.float32, -bound, bound)
        return w, b

    w1, b1 = linear(ks[0], ks[1], n_observations, hidden)
    w2, b2 = linear(ks[2], ks[3], hidden, hidden)
    w3, b3 = linear(ks[4], ks[5], hidden, n_actions)

    lane_pad = _round_up(n_actions, LANE)
    w3 = jnp.pad(w3, ((0, 0), (0, lane_pad - n_actions)))
    b3 = jnp.pad(b3, ((0, 0), (0, lane_pad - n_actions)))
    return {"w1": w1, "b1": b1, "w2": w2, "b2": b2, "w3": w3, "b3": b3}


if __name__ == "__main__":
    # LunarLander-v2: 8 observations, 4 actions; replay-sized batch.
    n_observations, n_actions, batch = 8, 4, 256

    key = jax.random.PRNGKey(0)
    k_params, k_x = jax.random.split(key)
    params = init_dqn_params(k_params, n_observations, n_actions)
    x = jax.random.normal(k_x, (batch, n_observations), dtype=jnp.float32)

    fwd = jax.jit(functools.partial(dqn_forward, n_actions=n_actions))
    act = jax.jit(functools.partial(dqn_act, n_actions=n_actions))

    # Pure-JAX reference (padded columns of w3/b3 are zero, so slicing matches).
    def ref_q(xv, p):
        h = jnp.maximum(xv @ p["w1"] + p["b1"], 0.0)
        h = jnp.maximum(h @ p["w2"] + p["b2"], 0.0)
        return (h @ p["w3"] + p["b3"])[:, :n_actions]

    # Training path: full Q-values.
    q = fwd(x, params)
    jax.block_until_ready(q)
    assert q.shape == (batch, n_actions)
    assert jnp.allclose(q, ref_q(x, params), atol=1e-5), "Q mismatch vs reference"

    # Acting path: fused argmax (no padded slab writeback, no wrapper slice).
    a = act(x, params)
    jax.block_until_ready(a)
    assert a.shape == (batch,)
    assert jnp.array_equal(a, jnp.argmax(ref_q(x, params), axis=-1)), "argmax mismatch"

    # Small-batch acting policy (B=8) exercises the grid=(1,) / padding path.
    x_small = x[:8]
    q_small = fwd(x_small, params)
    a_small = act(x_small, params)
    jax.block_until_ready((q_small, a_small))
    assert q_small.shape == (8, n_actions)
    assert jnp.allclose(q_small, ref_q(x_small, params), atol=1e-5), "small-batch mismatch"
    assert jnp.array_equal(a_small, jnp.argmax(ref_q(x_small, params), axis=-1))

    print("KERNEL_OK")
</pallas_src>

<mosaic_0001>
module attributes {stable_mosaic.version = 11 : i64} {
  func.func @dqn_q_kernel(%arg0: i32, %arg1: memref<128x8xf32, #tpu.memory_space<vmem>>, %arg2: memref<8x64xf32, #tpu.memory_space<vmem>>, %arg3: memref<1x64xf32, #tpu.memory_space<vmem>>, %arg4: memref<64x64xf32, #tpu.memory_space<vmem>>, %arg5: memref<1x64xf32, #tpu.memory_space<vmem>>, %arg6: memref<64x128xf32, #tpu.memory_space<vmem>>, %arg7: memref<1x128xf32, #tpu.memory_space<vmem>>, %arg8: memref<128x128xf32, #tpu.memory_space<vmem>>) attributes {dimension_semantics = [#tpu.dimension_semantics<parallel>], iteration_bounds = array<i64: 2>, scalar_prefetch = 0 : i64, scratch_operands = 0 : i64, tpu.core_type = #tpu.core_type<tc>, window_params = [{transform_indices = @transform_0, window_bounds = array<i64: 128, 8>}, {pipeline_mode = #tpu.pipeline_mode<synchronous>, transform_indices = @transform_1, window_bounds = array<i64: 8, 64>}, {pipeline_mode = #tpu.pipeline_mode<synchronous>, transform_indices = @transform_2, window_bounds = array<i64: 1, 64>}, {pipeline_mode = #tpu.pipeline_mode<synchronous>, transform_indices = @transform_3, window_bounds = array<i64: 64, 64>}, {pipeline_mode = #tpu.pipeline_mode<synchronous>, transform_indices = @transform_4, window_bounds = array<i64: 1, 64>}, {pipeline_mode = #tpu.pipeline_mode<synchronous>, transform_indices = @transform_5, window_bounds = array<i64: 64, 128>}, {pipeline_mode = #tpu.pipeline_mode<synchronous>, transform_indices = @transform_6, window_bounds = array<i64: 1, 128>}, {transform_indices = @transform_7, window_bounds = array<i64: 128, 128>}]} {
    %c0 = arith.constant 0 : index
    %c0_0 = arith.constant 0 : index
    %0 = vector.load %arg1[%c0, %c0_0] : memref<128x8xf32, #tpu.memory_space<vmem>>, vector<128x8xf32>
    %c0_1 = arith.constant 0 : index
    %c0_2 = arith.constant 0 : index
    %1 = vector.load %arg2[%c0_1, %c0_2] : memref<8x64xf32, #tpu.memory_space<vmem>>, vector<8x64xf32>
    %c0_3 = arith.constant 0 : index
    %c0_4 = arith.constant 0 : index
    %2 = vector.load %arg3[%c0_3, %c0_4] : memref<1x64xf32, #tpu.memory_space<vmem>>, vector<1x64xf32>
    %c0_5 = arith.constant 0 : index
    %c0_6 = arith.constant 0 : index
    %3 = vector.load %arg4[%c0_5, %c0_6] : memref<64x64xf32, #tpu.memory_space<vmem>>, vector<64x64xf32>
    %c0_7 = arith.constant 0 : index
    %c0_8 = arith.constant 0 : index
    %4 = vector.load %arg5[%c0_7, %c0_8] : memref<1x64xf32, #tpu.memory_space<vmem>>, vector<1x64xf32>
    %c0_9 = arith.constant 0 : index
    %c0_10 = arith.constant 0 : index
    %5 = vector.load %arg6[%c0_9, %c0_10] : memref<64x128xf32, #tpu.memory_space<vmem>>, vector<64x128xf32>
    %c0_11 = arith.constant 0 : index
    %c0_12 = arith.constant 0 : index
    %6 = vector.load %arg7[%c0_11, %c0_12] : memref<1x128xf32, #tpu.memory_space<vmem>>, vector<1x128xf32>
    %cst = arith.constant dense<0.000000e+00> : vector<128x64xf32>
    %7 = tpu.matmul %0, %1, %cst {dimension_numbers = #tpu.dot_dimension_numbers<[1], [0], [0], [1], [0, 0, 1, 1], [], []>} : vector<128x8xf32>, vector<8x64xf32>, vector<128x64xf32> -> vector<128x64xf32>
    %8 = vector.broadcast %2 : vector<1x64xf32> to vector<128x64xf32>
    %9 = arith.addf %7, %8 : vector<128x64xf32>
    %cst_13 = arith.constant 0.000000e+00 : f32
    %10 = vector.broadcast %cst_13 : f32 to vector<128x64xf32>
    %11 = arith.maximumf %9, %10 : vector<128x64xf32>
    %cst_14 = arith.constant dense<0.000000e+00> : vector<128x64xf32>
    %12 = tpu.matmul %11, %3, %cst_14 {dimension_numbers = #tpu.dot_dimension_numbers<[1], [0], [0], [1], [0, 0, 1, 1], [], []>} : vector<128x64xf32>, vector<64x64xf32>, vector<128x64xf32> -> vector<128x64xf32>
    %13 = vector.broadcast %4 : vector<1x64xf32> to vector<128x64xf32>
    %14 = arith.addf %12, %13 : vector<128x64xf32>
    %cst_15 = arith.constant 0.000000e+00 : f32
    %15 = vector.broadcast %cst_15 : f32 to vector<128x64xf32>
    %16 = arith.maximumf %14, %15 : vector<128x64xf32>
    %cst_16 = arith.constant dense<0.000000e+00> : vector<128x128xf32>
    %17 = tpu.matmul %16, %5, %cst_16 {dimension_numbers = #tpu.dot_dimension_numbers<[1], [0], [0], [1], [0, 0, 1, 1], [], []>} : vector<128x64xf32>, vector<64x128xf32>, vector<128x128xf32> -> vector<128x128xf32>
    %18 = vector.broadcast %6 : vector<1x128xf32> to vector<128x128xf32>
    %19 = arith.addf %17, %18 : vector<128x128xf32>
    %c0_17 = arith.constant 0 : index
    %c0_18 = arith.constant 0 : index
    %20 = vector.load %arg8[%c0_17, %c0_18] : memref<128x128xf32, #tpu.memory_space<vmem>>, vector<128x128xf32>
    tpu.vector_store %arg8[%c0_17, %c0_18], %19 {strides = array<i32>} : memref<128x128xf32, #tpu.memory_space<vmem>>, vector<128x128xf32>,
    return
  }
  func.func @transform_0(%arg0: i32) -> (i32, i32) {
    %c0_i32 = arith.constant 0 : i32
    %c0_i32_0 = arith.constant 0 : i32
    return %arg0, %c0_i32 : i32, i32
  }
  func.func @transform_1(%arg0: i32) -> (i32, i32) {
    %c0_i32 = arith.constant 0 : i32
    %c0_i32_0 = arith.constant 0 : i32
    %c0_i32_1 = arith.constant 0 : i32
    return %c0_i32, %c0_i32_0 : i32, i32
  }
  func.func @transform_2(%arg0: i32) -> (i32, i32) {
    %c0_i32 = arith.constant 0 : i32
    %c0_i32_0 = arith.constant 0 : i32
    %c0_i32_1 = arith.constant 0 : i32
    return %c0_i32, %c0_i32_0 : i32, i32
  }
  func.func @transform_3(%arg0: i32) -> (i32, i32) {
    %c0_i32 = arith.constant 0 : i32
    %c0_i32_0 = arith.constant 0 : i32
    %c0_i32_1 = arith.constant 0 : i32
    return %c0_i32, %c0_i32_0 : i32, i32
  }
  func.func @transform_4(%arg0: i32) -> (i32, i32) {
    %c0_i32 = arith.constant 0 : i32
    %c0_i32_0 = arith.constant 0 : i32
    %c0_i32_1 = arith.constant 0 : i32
    return %c0_i32, %c0_i32_0 : i32, i32
  }
  func.func @transform_5(%arg0: i32) -> (i32, i32) {
    %c0_i32 = arith.constant 0 : i32
    %c0_i32_0 = arith.constant 0 : i32
    %c0_i32_1 = arith.constant 0 : i32
    return %c0_i32, %c0_i32_0 : i32, i32
  }
  func.func @transform_6(%arg0: i32) -> (i32, i32) {
    %c0_i32 = arith.constant 0 : i32
    %c0_i32_0 = arith.constant 0 : i32
    %c0_i32_1 = arith.constant 0 : i32
    return %c0_i32, %c0_i32_0 : i32, i32
  }
  func.func @transform_7(%arg0: i32) -> (i32, i32) {
    %c0_i32 = arith.constant 0 : i32
    %c0_i32_0 = arith.constant 0 : i32
    return %arg0, %c0_i32 : i32, i32
  }
}

</mosaic_0001>

<llo_original>
// kernel: dqn_forward.1
$region0: #{dqn_forward.1}
  #allocation0 [shape = 'u32[]', space=smem, size = 0x4, offset = 0x4, fixed_abs, tag = 'smem constant byte address 0x4 - core index']
  #allocation1 [shape = 'u32[144,128]{1,0:T(1,128)}', space=vmem, size = 0x12000, scoped, tag = 'internal scratch']
  %s0 = inlined_call_operand.vmem [shape: f32[256,8], index: 0, kind: input, shape index: {}]
  %s1 = inlined_call_operand.vmem [shape: f32[8,64], index: 1, kind: input, shape index: {}]
  %s2 = inlined_call_operand.vmem [shape: f32[1,64], index: 2, kind: input, shape index: {}]
  %s3 = inlined_call_operand.vmem [shape: f32[64,64], index: 3, kind: input, shape index: {}]
  %s4 = inlined_call_operand.vmem [shape: f32[1,64], index: 4, kind: input, shape index: {}]
  %s5 = inlined_call_operand.vmem [shape: f32[64,128], index: 5, kind: input, shape index: {}]
  %s6 = inlined_call_operand.vmem [shape: f32[1,128], index: 6, kind: input, shape index: {}]
  %s7 = inlined_call_operand.vmem [shape: f32[256,128], index: 7, kind: output, shape index: {}]
  %s8 = sld [smem:[#allocation0]]
  $region61: #{dqn_forward.1} parent=0
    _
  %s10 = ssub.s32 1, %s8
  %s11 = scalar_select 0, %s10, %s8
  loop: start=0, step=1, limit=4
  $region2: #{dqn_forward.1} parent=0 // loop_pre_header
    _
  $region3: #{dqn_forward.1} parent=0 // loop_header
    %s13 = sphi 0, %s17
    %p14 = scmp.ge.s32.totalorder %s13, 4
    %s23 = sphi 0, %s25
    %s26 = sphi 0, %s23
    %s27 = sphi 0, %s26
    %s43 = sphi 0, %s27
    %s47 = sphi 0, %s47
    %s49 = sphi 0, %s47
    %s50 = sphi 0, %s49
    %s64 = sphi 0, %s50
    %s68 = sphi 0, %s68
    %s70 = sphi 0, %s68
    %s71 = sphi 0, %s70
    %s85 = sphi 0, %s71
    %s89 = sphi 0, %s89
    %s91 = sphi 0, %s89
    %s92 = sphi 0, %s91
    %s106 = sphi 0, %s92
    %s110 = sphi 0, %s110
    %s112 = sphi 0, %s110
    %s113 = sphi 0, %s112
    %s127 = sphi 0, %s113
    %s131 = sphi 0, %s131
    %s133 = sphi 0, %s131
    %s134 = sphi 0, %s133
    %s148 = sphi 0, %s134
    %s152 = sphi 0, %s152
    %s154 = sphi 0, %s152
    %s155 = sphi 0, %s154
    %s169 = sphi 0, %s155
    %s175 = sphi 0, %s177
    %s178 = sphi 0, %s175
    %s179 = sphi 0, %s178
    %s195 = sphi 0, %s179
  $region4: #{dqn_forward.1} parent=0 // loop_header_branch
    %16 = sbr.rel (%p14) target = $region8
  $region5: #{dqn_forward.1} parent=0 // loop_body
    %s18 = ssub.s32 %s13, 1
    %s19 = ssub.s32 %s13, 2
    %s20 = sadd.s32 %s13, 1
    %s21 = ssub.s32 %s13, %s20
    %p22 = scmp.eq.s32.totalorder %s21, 0
    %s24 = sadd.s32 %s23, 1
    %s25 = scalar_select %p22, %s23, %s24
    %p28 = pneg %p22
    %p29 = scmp.eq.s32.totalorder %s13, 1
    %p30 = por %p28, %p29
    %p31 = scmp.ne.s32.totalorder %s23, %s26
    %p32 = scmp.eq.s32.totalorder %s13, 0
    %p33 = por %p31, %p32
    %p34 = scmp.ne.s32.totalorder %s23, %s26
    %p35 = scmp.eq.s32.totalorder %s18, 1
    %p36 = por %p34, %p35
    %p37 = scmp.ne.s32.totalorder %s26, %s27
    %p38 = scmp.eq.s32.totalorder %s18, 0
    %p39 = por %p37, %p38
    %p40 = scmp.ne.s32.totalorder %s26, %s27
    %p41 = scmp.eq.s32.totalorder %s19, 1
    %p42 = por %p40, %p41
    %p44 = scmp.ne.s32.totalorder %s27, %s43
    %p45 = scmp.eq.s32.totalorder %s19, 0
    %p46 = por %p44, %p45
    %s48 = sadd.s32 %s47, 1
    %p51 = scmp.eq.s32.totalorder %s13, 1
    %p52 = scmp.ne.s32.totalorder %s47, %s49
    %p53 = scmp.eq.s32.totalorder %s13, 0
    %p54 = por %p52, %p53
    %p55 = scmp.ne.s32.totalorder %s47, %s49
    %p56 = scmp.eq.s32.totalorder %s18, 1
    %p57 = por %p55, %p56
    %p58 = scmp.ne.s32.totalorder %s49, %s50
    %p59 = scmp.eq.s32.totalorder %s18, 0
    %p60 = por %p58, %p59
    %p61 = scmp.ne.s32.totalorder %s49, %s50
    %p62 = scmp.eq.s32.totalorder %s19, 1
    %p63 = por %p61, %p62
    %p65 = scmp.ne.s32.totalorder %s50, %s64
    %p66 = scmp.eq.s32.totalorder %s19, 0
    %p67 = por %p65, %p66
    %s69 = sadd.s32 %s68, 1
    %p72 = scmp.eq.s32.totalorder %s13, 1
    %p73 = scmp.ne.s32.totalorder %s68, %s70
    %p74 = scmp.eq.s32.totalorder %s13, 0
    %p75 = por %p73, %p74
    %p76 = scmp.ne.s32.totalorder %s68, %s70
    %p77 = scmp.eq.s32.totalorder %s18, 1
    %p78 = por %p76, %p77
    %p79 = scmp.ne.s32.totalorder %s70, %s71
    %p80 = scmp.eq.s32.totalorder %s18, 0
    %p81 = por %p79, %p80
    %p82 = scmp.ne.s32.totalorder %s70, %s71
    %p83 = scmp.eq.s32.totalorder %s19, 1
    %p84 = por %p82, %p83
    %p86 = scmp.ne.s32.totalorder %s71, %s85
    %p87 = scmp.eq.s32.totalorder %s19, 0
    %p88 = por %p86, %p87
    %s90 = sadd.s32 %s89, 1
    %p93 = scmp.eq.s32.totalorder %s13, 1
    %p94 = scmp.ne.s32.totalorder %s89, %s91
    %p95 = scmp.eq.s32.totalorder %s13, 0
    %p96 = por %p94, %p95
    %p97 = scmp.ne.s32.totalorder %s89, %s91
    %p98 = scmp.eq.s32.totalorder %s18, 1
    %p99 = por %p97, %p98
    %p100 = scmp.ne.s32.totalorder %s91, %s92
    %p101 = scmp.eq.s32.totalorder %s18, 0
    %p102 = por %p100, %p101
    %p103 = scmp.ne.s32.totalorder %s91, %s92
    %p104 = scmp.eq.s32.totalorder %s19, 1
    %p105 = por %p103, %p104
    %p107 = scmp.ne.s32.totalorder %s92, %s106
    %p108 = scmp.eq.s32.totalorder %s19, 0
    %p109 = por %p107, %p108
    %s111 = sadd.s32 %s110, 1
    %p114 = scmp.eq.s32.totalorder %s13, 1
    %p115 = scmp.ne.s32.totalorder %s110, %s112
    %p116 = scmp.eq.s32.totalorder %s13, 0
    %p117 = por %p115, %p116
    %p118 = scmp.ne.s32.totalorder %s110, %s112
    %p119 = scmp.eq.s32.totalorder %s18, 1
    %p120 = por %p118, %p119
    %p121 = scmp.ne.s32.totalorder %s112, %s113
    %p122 = scmp.eq.s32.totalorder %s18, 0
    %p123 = por %p121, %p122
    %p124 = scmp.ne.s32.totalorder %s112, %s113
    %p125 = scmp.eq.s32.totalorder %s19, 1
    %p126 = por %p124, %p125
    %p128 = scmp.ne.s32.totalorder %s113, %s127
    %p129 = scmp.eq.s32.totalorder %s19, 0
    %p130 = por %p128, %p129
    %s132 = sadd.s32 %s131, 1
    %p135 = scmp.eq.s32.totalorder %s13, 1
    %p136 = scmp.ne.s32.totalorder %s131, %s133
    %p137 = scmp.eq.s32.totalorder %s13, 0
    %p138 = por %p136, %p137
    %p139 = scmp.ne.s32.totalorder %s131, %s133
    %p140 = scmp.eq.s32.totalorder %s18, 1
    %p141 = por %p139, %p140
    %p142 = scmp.ne.s32.totalorder %s133, %s134
    %p143 = scmp.eq.s32.totalorder %s18, 0
    %p144 = por %p142, %p143
    %p145 = scmp.ne.s32.totalorder %s133, %s134
    %p146 = scmp.eq.s32.totalorder %s19, 1
    %p147 = por %p145, %p146
    %p149 = scmp.ne.s32.totalorder %s134, %s148
    %p150 = scmp.eq.s32.totalorder %s19, 0
    %p151 = por %p149, %p150
    %s153 = sadd.s32 %s152, 1
    %p156 = scmp.eq.s32.totalorder %s13, 1
    %p157 = scmp.ne.s32.totalorder %s152, %s154
    %p158 = scmp.eq.s32.totalorder %s13, 0
    %p159 = por %p157, %p158
    %p160 = scmp.ne.s32.totalorder %s152, %s154
    %p161 = scmp.eq.s32.totalorder %s18, 1
    %p162 = por %p160, %p161
    %p163 = scmp.ne.s32.totalorder %s154, %s155
    %p164 = scmp.eq.s32.totalorder %s18, 0
    %p165 = por %p163, %p164
    %p166 = scmp.ne.s32.totalorder %s154, %s155
    %p167 = scmp.eq.s32.totalorder %s19, 1
    %p168 = por %p166, %p167
    %p170 = scmp.ne.s32.totalorder %s155, %s169
    %p171 = scmp.eq.s32.totalorder %s19, 0
    %p172 = por %p170, %p171
    %s173 = ssub.s32 %s13, %s20
    %p174 = scmp.eq.s32.totalorder %s173, 0
    %s176 = sadd.s32 %s175, 1
    %s177 = scalar_select %p174, %s175, %s176
    %p180 = pneg %p174
    %p181 = scmp.eq.s32.totalorder %s13, 1
    %p182 = por %p180, %p181
    %p183 = scmp.ne.s32.totalorder %s175, %s178
    %p184 = scmp.eq.s32.totalorder %s13, 0
    %p185 = por %p183, %p184
    %p186 = scmp.ne.s32.totalorder %s175, %s178
    %p187 = scmp.eq.s32.totalorder %s18, 1
    %p188 = por %p186, %p187
    %p189 = scmp.ne.s32.totalorder %s178, %s179
    %p190 = scmp.eq.s32.totalorder %s18, 0
    %p191 = por %p189, %p190
    %p192 = scmp.ne.s32.totalorder %s178, %s179
    %p193 = scmp.eq.s32.totalorder %s19, 1
    %p194 = por %p192, %p193
    %p196 = scmp.ne.s32.totalorder %s179, %s195
    %p197 = scmp.eq.s32.totalorder %s19, 0
    %p198 = por %p196, %p197
    %p199 = scmp.le.s32.totalorder 1, %s13
    %p200 = scmp.lt.s32.totalorder %s13, 3
    %p201 = pnand %p199, %p200
    %p202 = pneg %p201
    // Predicated region
    $region9: #{dqn_forward.1} parent=5 // pred_check
      _
    $region10: #{dqn_forward.1} parent=5 // pred_check_branch
      %204 = sbr.rel (%p201) target = $region12
    $region11: #{dqn_forward.1} parent=5 // pred_region
      %s205 = ssub.s32 %s13, 1
      // Predicated region
      $region13: #{dqn_forward.1} parent=11 // pred_check
        %p206 = pneg %p60
      $region14: #{dqn_forward.1} parent=11 // pred_check_branch
        %208 = sbr.rel (%p206) target = $region16
      $region15: #{dqn_forward.1} parent=11 // pred_region
        _
      $region16: #{dqn_forward.1} parent=11 // pred_fallthru
        _
      // Predicated region
      $region17: #{dqn_forward.1} parent=11 // pred_check
        %p209 = pneg %p81
      $region18: #{dqn_forward.1} parent=11 // pred_check_branch
        %211 = sbr.rel (%p209) target = $region20
      $region19: #{dqn_forward.1} parent=11 // pred_region
        _
      $region20: #{dqn_forward.1} parent=11 // pred_fallthru
        _
      // Predicated region
      $region21: #{dqn_forward.1} parent=11 // pred_check
        %p212 = pneg %p102
      $region22: #{dqn_forward.1} parent=11 // pred_check_branch
        %214 = sbr.rel (%p212) target = $region24
      $region23: #{dqn_forward.1} parent=11 // pred_region
        _
      $region24: #{dqn_forward.1} parent=11 // pred_fallthru
        _
      // Predicated region
      $region25: #{dqn_forward.1} parent=11 // pred_check
        %p215 = pneg %p123
      $region26: #{dqn_forward.1} parent=11 // pred_check_branch
        %217 = sbr.rel (%p215) target = $region28
      $region27: #{dqn_forward.1} parent=11 // pred_region
        _
      $region28: #{dqn_forward.1} parent=11 // pred_fallthru
        _
      // Predicated region
      $region29: #{dqn_forward.1} parent=11 // pred_check
        %p218 = pneg %p144
      $region30: #{dqn_forward.1} parent=11 // pred_check_branch
        %220 = sbr.rel (%p218) target = $region32
      $region31: #{dqn_forward.1} parent=11 // pred_region
        _
      $region32: #{dqn_forward.1} parent=11 // pred_fallthru
        _
      // Predicated region
      $region33: #{dqn_forward.1} parent=11 // pred_check
        %p221 = pneg %p165
      $region34: #{dqn_forward.1} parent=11 // pred_check_branch
        %223 = sbr.rel (%p221) target = $region36
      $region35: #{dqn_forward.1} parent=11 // pred_region
        _
      $region36: #{dqn_forward.1} parent=11 // pred_fallthru
        _
    $region12: #{dqn_forward.1} parent=5 // pred_fallthru
      _
    %p224 = scmp.lt.s32.totalorder %s13, 2
    // Predicated region
    $region37: #{dqn_forward.1} parent=5 // pred_check
      %p225 = pneg %p224
    $region38: #{dqn_forward.1} parent=5 // pred_check_branch
      %227 = sbr.rel (%p225) target = $region40
    $region39: #{dqn_forward.1} parent=5 // pred_region
      // Predicated region
      $region41: #{dqn_forward.1} parent=39 // pred_check
        %p228 = pneg %p33
      $region42: #{dqn_forward.1} parent=39 // pred_check_branch
        %230 = sbr.rel (%p228) target = $region44
      $region43: #{dqn_forward.1} parent=39 // pred_region
        %s231 = smul.u32 16, %s13
        %p232 = scmp.lt.s32.totalorder %s231, 31
        %s233 = scalar_select %p232, %s231, 31
        %s234 = smul.addr %s233, 8
        %s235 = scalar_lea.vmem %s0, %s234
        %s236 = smul.u32 16, %s13
      $region44: #{dqn_forward.1} parent=39 // pred_fallthru
        _
    $region40: #{dqn_forward.1} parent=5 // pred_fallthru
      _
    %p237 = scmp.le.s32.totalorder 1, %s13
    %p238 = scmp.lt.s32.totalorder %s13, 3
    %p239 = pnand %p237, %p238
    %p240 = pneg %p239
    // Predicated region
    $region45: #{dqn_forward.1} parent=5 // pred_check
      _
    $region46: #{dqn_forward.1} parent=5 // pred_check_branch
      %242 = sbr.rel (%p239) target = $region48
    $region47: #{dqn_forward.1} parent=5 // pred_region
      %s243 = ssub.s32 %s13, 1
      %s244 = smul.u32 16, %s18
      %p245 = scmp.lt.s32.totalorder %s244, 31
      %s246 = scalar_select %p245, %s244, 31
      %s247 = smul.addr %s246, 8
      %s248 = scalar_lea.vmem %s0, %s247
      %p249 = pneg %p39
      %p250 = pneg %p36
      %p251 = pneg %p60
      %p252 = pneg %p57
      %p253 = pneg %p81
      %p254 = pneg %p78
      %p255 = pneg %p102
      %p256 = pneg %p99
      %p257 = pneg %p123
      %p258 = pneg %p120
      %p259 = pneg %p144
      %p260 = pneg %p141
      %p261 = pneg %p165
      %p262 = pneg %p162
      %p263 = pneg %p191
      %p264 = pneg %p188
      %s265 = smul.u32 16, %s18
      %p266 = scmp.lt.s32.totalorder %s265, 31
      %s267 = scalar_select %p266, %s265, 31
      %s268 = smul.addr %s267, 8
      %s269 = scalar_lea.vmem %s7, %s268
      %s270 = smul.u32 16, %s18
      %p271 = scmp.lt.s32.totalorder %s270, 31
      %s272 = scalar_select %p271, %s270, 31
      %s273 = smul.addr %s272, 8
      %s274 = scalar_lea.vmem %s0, %s273
      %s275 = smul.u32 16, %s18
      %s276 = smul.u32 16, %s18
      %p277 = scmp.lt.s32.totalorder %s276, 31
      %s278 = scalar_select %p277, %s276, 31
      %s279 = smul.addr %s278, 8
      %s280 = scalar_lea.vmem %s7, %s279
      %s281 = smul.u32 16, %s18
      %v282 = vld [vmem:[%s274] sm:$0xff]
      %v283 = vld [vmem:[%s274 + $0x8] sm:$0xff]
      %v284 = vld [vmem:[%s274 + $0x10] sm:$0xff]
      %v285 = vld [vmem:[%s274 + $0x18] sm:$0xff]
      %v286 = vld [vmem:[%s274 + $0x20] sm:$0xff]
      %v287 = vld [vmem:[%s274 + $0x28] sm:$0xff]
      %v288 = vld [vmem:[%s274 + $0x30] sm:$0xff]
      %v289 = vld [vmem:[%s274 + $0x38] sm:$0xff]
      %v290 = vld [vmem:[%s274 + $0x40] sm:$0xff]
      %v291 = vld [vmem:[%s274 + $0x48] sm:$0xff]
      %v292 = vld [vmem:[%s274 + $0x50] sm:$0xff]
      %v293 = vld [vmem:[%s274 + $0x58] sm:$0xff]
      %v294 = vld [vmem:[%s274 + $0x60] sm:$0xff]
      %v295 = vld [vmem:[%s274 + $0x68] sm:$0xff]
      %v296 = vld [vmem:[%s274 + $0x70] sm:$0xff]
      %v297 = vld [vmem:[%s274 + $0x78] sm:$0xff]
      %v298 = vld [vmem:[%s1] sm:$0xff]
      %v299 = vld [vmem:[%s2] sm:$0x1]
      %v300 = vld [vmem:[%s3] sm:$0xff]
      %v301 = vld [vmem:[%s3 + $0x8] sm:$0xff]
      %v302 = vld [vmem:[%s3 + $0x10] sm:$0xff]
      %v303 = vld [vmem:[%s3 + $0x18] sm:$0xff]
      %v304 = vld [vmem:[%s3 + $0x20] sm:$0xff]
      %v305 = vld [vmem:[%s3 + $0x28] sm:$0xff]
      %v306 = vld [vmem:[%s3 + $0x30] sm:$0xff]
      %v307 = vld [vmem:[%s3 + $0x38] sm:$0xff]
      %v308 = vld [vmem:[%s4] sm:$0x1]
      %v309 = vld [vmem:[%s5] sm:$0xff]
      %v310 = vld [vmem:[%s5 + $0x8] sm:$0xff]
      %v311 = vld [vmem:[%s5 + $0x10] sm:$0xff]
      %v312 = vld [vmem:[%s5 + $0x18] sm:$0xff]
      %v313 = vld [vmem:[%s5 + $0x20] sm:$0xff]
      %v314 = vld [vmem:[%s5 + $0x28] sm:$0xff]
      %v315 = vld [vmem:[%s5 + $0x30] sm:$0xff]
      %v316 = vld [vmem:[%s5 + $0x38] sm:$0xff]
      %v317 = vld [vmem:[%s6] sm:$0x1]
      %v319 = vlaneseq
      %v320 = vshrl.u32 %v319, 7
      %v321 = vsub.s32 0, %v320
      %v322 = vrot.slane %v299, %v321
      %vm324 = vcmask 64512
      %v326 = vsel %vm324, %v282, 0
      %v329 = vsel %vm324, %v283, 0
      %v332 = vsel %vm324, %v284, 0
      %v335 = vsel %vm324, %v285, 0
      %v338 = vsel %vm324, %v286, 0
      %v341 = vsel %vm324, %v287, 0
      %v344 = vsel %vm324, %v288, 0
      %v347 = vsel %vm324, %v289, 0
      %v350 = vsel %vm324, %v290, 0
      %v353 = vsel %vm324, %v291, 0
      %v356 = vsel %vm324, %v292, 0
      %v359 = vsel %vm324, %v293, 0
      %v362 = vsel %vm324, %v294, 0
      %v365 = vsel %vm324, %v295, 0
      %v368 = vsel %vm324, %v296, 0
      %v371 = vsel %vm324, %v297, 0
      %373 = vmatprep.subr.mxu0 0.0
      %374 = vmatpush1.msra.mxu0 %v298
      %375 = vmatprep.subr.mxu0 0.0
      %376 = vmatpush1.msra.mxu0 0.0
      %377 = vmatprep.subr.mxu0 0.0
      %378 = vmatpush1.msra.mxu0 0.0
      %379 = vmatprep.subr.mxu0 0.0
      %380 = vmatpush1.msra.mxu0 0.0
      %381 = vmatprep.subr.mxu0 0.0
      %382 = vmatpush1.msra.mxu0 0.0
      %383 = vmatprep.subr.mxu0 0.0
      %384 = vmatpush1.msra.mxu0 0.0
      %385 = vmatprep.subr.mxu0 0.0
      %386 = vmatpush1.msra.mxu0 0.0
      %387 = vmatprep.subr.mxu0 0.0
      %388 = vmatpush1.msra.mxu0 0.0
      %389 = vmatprep.subr.mxu0 0.0
      %390 = vmatpush1.msra.mxu0 0.0
      %391 = vmatprep.subr.mxu0 0.0
      %392 = vmatpush1.msra.mxu0 0.0
      %393 = vmatprep.subr.mxu0 0.0
      %394 = vmatpush1.msra.mxu0 0.0
      %395 = vmatprep.subr.mxu0 0.0
      %396 = vmatpush1.msra.mxu0 0.0
      %397 = vmatprep.subr.mxu0 0.0
      %398 = vmatpush1.msra.mxu0 0.0
      %399 = vmatprep.subr.mxu0 0.0
      %400 = vmatpush1.msra.mxu0 0.0
      %401 = vmatprep.subr.mxu0 0.0
      %402 = vmatpush1.msra.mxu0 0.0
      %403 = vmatprep.subr.mxu0 0.0
      %404 = vmatpush1.msra.mxu0 0.0
      %405 = vmatprep.subr.mxu0 0.0
      %406 = vmatpush1.msra.mxu0 0.0
      %407 = vmatprep.subr.mxu0 0.0
      %408 = vmatpush1.msra.mxu0 0.0
      %409 = vmatprep.subr.mxu0 0.0
      %410 = vmatpush1.msra.mxu0 0.0
      %411 = vmatprep.subr.mxu0 0.0
      %412 = vmatpush1.msra.mxu0 0.0
      %413 = vmatprep.subr.mxu0 0.0
      %414 = vmatpush1.msra.mxu0 0.0
      %415 = vmatprep.subr.mxu0 0.0
      %416 = vmatpush1.msra.mxu0 0.0
      %417 = vmatprep.subr.mxu0 0.0
      %418 = vmatpush1.msra.mxu0 0.0
      %419 = vmatprep.subr.mxu0 0.0
      %420 = vmatpush1.msra.mxu0 0.0
      %421 = vmatprep.subr.mxu0 0.0
      %422 = vmatpush1.msra.mxu0 0.0
      %423 = vmatprep.subr.mxu0 0.0
      %424 = vmatpush1.msra.mxu0 0.0
      %425 = vmatprep.subr.mxu0 0.0
      %426 = vmatpush1.msra.mxu0 0.0
      %427 = vmatprep.subr.mxu0 0.0
      %428 = vmatpush1.msra.mxu0 0.0
      %429 = vmatprep.subr.mxu0 0.0
      %430 = vmatpush1.msra.mxu0 0.0
      %431 = vmatprep.subr.mxu0 0.0
      %432 = vmatpush1.msra.mxu0 0.0
      %433 = vmatprep.subr.mxu0 0.0
      %434 = vmatpush1.msra.mxu0 0.0
      %435 = vmatprep.subr.mxu0 0.0
      %436 = vmatpush1.msra.mxu0 0.0
      %437 = vmatprep.mubr.f32.mxu0 0.0
      %438 = vmatmul.mubr.f32.gmra.mrb[0].mxu0 %v326
      %v439 = vpop.f32.mrb[0].mxu0
      %v440 = vadd.f32 %v322, %v439
      %v441 = vpop.f32.mrb[0].mxu0
      %442 = vmatprep.mubr.f32.mxu0 0.0
      %443 = vmatmul.mubr.f32.gmra.mrb[0].mxu0 %v329
      %v444 = vpop.f32.mrb[0].mxu0
      %v445 = vadd.f32 %v322, %v444
      %v446 = vpop.f32.mrb[0].mxu0
      %447 = vmatprep.mubr.f32.mxu0 0.0
      %448 = vmatmul.mubr.f32.gmra.mrb[0].mxu0 %v332
      %v449 = vpop.f32.mrb[0].mxu0
      %v450 = vadd.f32 %v322, %v449
      %v451 = vpop.f32.mrb[0].mxu0
      %452 = vmatprep.mubr.f32.mxu0 0.0
      %453 = vmatmul.mubr.f32.gmra.mrb[0].mxu0 %v335
      %v454 = vpop.f32.mrb[0].mxu0
      %v455 = vadd.f32 %v322, %v454
      %v456 = vpop.f32.mrb[0].mxu0
      %457 = vmatprep.mubr.f32.mxu0 0.0
      %458 = vmatmul.mubr.f32.gmra.mrb[0].mxu0 %v338
      %v459 = vpop.f32.mrb[0].mxu0
      %v460 = vadd.f32 %v322, %v459
      %v461 = vpop.f32.mrb[0].mxu0
      %462 = vmatprep.mubr.f32.mxu0 0.0
      %463 = vmatmul.mubr.f32.gmra.mrb[0].mxu0 %v341
      %v464 = vpop.f32.mrb[0].mxu0
      %v465 = vadd.f32 %v322, %v464
      %v466 = vpop.f32.mrb[0].mxu0
      %467 = vmatprep.mubr.f32.mxu0 0.0
      %468 = vmatmul.mubr.f32.gmra.mrb[0].mxu0 %v344
      %v469 = vpop.f32.mrb[0].mxu0
      %v470 = vadd.f32 %v322, %v469
      %v471 = vpop.f32.mrb[0].mxu0
      %472 = vmatprep.mubr.f32.mxu0 0.0
      %473 = vmatmul.mubr.f32.gmra.mrb[0].mxu0 %v347
      %v474 = vpop.f32.mrb[0].mxu0
      %v475 = vadd.f32 %v322, %v474
      %v476 = vpop.f32.mrb[0].mxu0
      %477 = vmatprep.mubr.f32.mxu0 0.0
      %478 = vmatmul.mubr.f32.gmra.mrb[0].mxu0 %v350
      %v479 = vpop.f32.mrb[0].mxu0
      %v480 = vadd.f32 %v322, %v479
      %v481 = vpop.f32.mrb[0].mxu0
      %482 = vmatprep.mubr.f32.mxu0 0.0
      %483 = vmatmul.mubr.f32.gmra.mrb[0].mxu0 %v353
      %v484 = vpop.f32.mrb[0].mxu0
      %v485 = vadd.f32 %v322, %v484
      %v486 = vpop.f32.mrb[0].mxu0
      %487 = vmatprep.mubr.f32.mxu0 0.0
      %488 = vmatmul.mubr.f32.gmra.mrb[0].mxu0 %v356
      %v489 = vpop.f32.mrb[0].mxu0
      %v490 = vadd.f32 %v322, %v489
      %v491 = vpop.f32.mrb[0].mxu0
      %492 = vmatprep.mubr.f32.mxu0 0.0
      %493 = vmatmul.mubr.f32.gmra.mrb[0].mxu0 %v359
      %v494 = vpop.f32.mrb[0].mxu0
      %v495 = vadd.f32 %v322, %v494
      %v496 = vpop.f32.mrb[0].mxu0
      %497 = vmatprep.mubr.f32.mxu0 0.0
      %498 = vmatmul.mubr.f32.gmra.mrb[0].mxu0 %v362
      %v499 = vpop.f32.mrb[0].mxu0
      %v500 = vadd.f32 %v322, %v499
      %v501 = vpop.f32.mrb[0].mxu0
      %502 = vmatprep.mubr.f32.mxu0 0.0
      %503 = vmatmul.mubr.f32.gmra.mrb[0].mxu0 %v365
      %v504 = vpop.f32.mrb[0].mxu0
      %v505 = vadd.f32 %v322, %v504
      %v506 = vpop.f32.mrb[0].mxu0
      %507 = vmatprep.mubr.f32.mxu0 0.0
      %508 = vmatmul.mubr.f32.gmra.mrb[0].mxu0 %v368
      %v509 = vpop.f32.mrb[0].mxu0
      %v510 = vadd.f32 %v322, %v509
      %v511 = vpop.f32.mrb[0].mxu0
      %512 = vmatprep.mubr.f32.mxu0 0.0
      %513 = vmatmul.mubr.f32.gmra.mrb[0].mxu0 %v371
      %v514 = vpop.f32.mrb[0].mxu0
      %v515 = vadd.f32 %v322, %v514
      %v516 = vpop.f32.mrb[0].mxu0
      %517 = vdwg.mxu0
      %v518 = vmax.f32 %v440, 0.0
      %v519 = vmax.f32 %v445, 0.0
      %v520 = vmax.f32 %v450, 0.0
      %v521 = vmax.f32 %v455, 0.0
      %v522 = vmax.f32 %v460, 0.0
      %v523 = vmax.f32 %v465, 0.0
      %v524 = vmax.f32 %v470, 0.0
      %v525 = vmax.f32 %v475, 0.0
      %v526 = vmax.f32 %v480, 0.0
      %v527 = vmax.f32 %v485, 0.0
      %v528 = vmax.f32 %v490, 0.0
      %v529 = vmax.f32 %v495, 0.0
      %v530 = vmax.f32 %v500, 0.0
      %v531 = vmax.f32 %v505, 0.0
      %v532 = vmax.f32 %v510, 0.0
      %v533 = vmax.f32 %v515, 0.0
      %v535 = vlaneseq
      %v536 = vshrl.u32 %v535, 7
      %v537 = vsub.s32 0, %v536
      %v538 = vrot.slane %v308, %v537
      %vm540 = vcmask 523264
      %v542 = vsel %vm540, %v518, 0
      %v545 = vsel %vm540, %v519, 0
      %v548 = vsel %vm540, %v520, 0
      %v551 = vsel %vm540, %v521, 0
      %v554 = vsel %vm540, %v522, 0
      %v557 = vsel %vm540, %v523, 0
      %v560 = vsel %vm540, %v524, 0
      %v563 = vsel %vm540, %v525, 0
      %v566 = vsel %vm540, %v526, 0
      %v569 = vsel %vm540, %v527, 0
      %v572 = vsel %vm540, %v528, 0
      %v575 = vsel %vm540, %v529, 0
      %v578 = vsel %vm540, %v530, 0
      %v581 = vsel %vm540, %v531, 0
      %v584 = vsel %vm540, %v532, 0
      %v587 = vsel %vm540, %v533, 0
      %589 = vmatprep.subr.mxu0 0.0
      %590 = vmatpush1.msra.mxu0 %v300
      %591 = vmatprep.subr.mxu0 0.0
      %592 = vmatpush1.msra.mxu0 %v301
      %593 = vmatprep.subr.mxu0 0.0
      %594 = vmatpush1.msra.mxu0 %v302
      %595 = vmatprep.subr.mxu0 0.0
      %596 = vmatpush1.msra.mxu0 %v303
      %597 = vmatprep.subr.mxu0 0.0
      %598 = vmatpush1.msra.mxu0 %v304
      %599 = vmatprep.subr.mxu0 0.0
      %600 = vmatpush1.msra.mxu0 %v305
      %601 = vmatprep.subr.mxu0 0.0
      %602 = vmatpush1.msra.mxu0 %v306
      %603 = vmatprep.subr.mxu0 0.0
      %604 = vmatpush1.msra.mxu0 %v307
      %605 = vmatprep.subr.mxu0 0.0
      %606 = vmatpush1.msra.mxu0 0.0
      %607 = vmatprep.subr.mxu0 0.0
      %608 = vmatpush1.msra.mxu0 0.0
      %609 = vmatprep.subr.mxu0 0.0
      %610 = vmatpush1.msra.mxu0 0.0
      %611 = vmatprep.subr.mxu0 0.0
      %612 = vmatpush1.msra.mxu0 0.0
      %613 = vmatprep.subr.mxu0 0.0
      %614 = vmatpush1.msra.mxu0 0.0
      %615 = vmatprep.subr.mxu0 0.0
      %616 = vmatpush1.msra.mxu0 0.0
      %617 = vmatprep.subr.mxu0 0.0
      %618 = vmatpush1.msra.mxu0 0.0
      %619 = vmatprep.subr.mxu0 0.0
      %620 = vmatpush1.msra.mxu0 0.0
      %621 = vmatprep.subr.mxu0 0.0
      %622 = vmatpush1.msra.mxu0 0.0
      %623 = vmatprep.subr.mxu0 0.0
      %624 = vmatpush1.msra.mxu0 0.0
      %625 = vmatprep.subr.mxu0 0.0
      %626 = vmatpush1.msra.mxu0 0.0
      %627 = vmatprep.subr.mxu0 0.0
      %628 = vmatpush1.msra.mxu0 0.0
      %629 = vmatprep.subr.mxu0 0.0
      %630 = vmatpush1.msra.mxu0 0.0
      %631 = vmatprep.subr.mxu0 0.0
      %632 = vmatpush1.msra.mxu0 0.0
      %633 = vmatprep.subr.mxu0 0.0
      %634 = vmatpush1.msra.mxu0 0.0
      %635 = vmatprep.subr.mxu0 0.0
      %636 = vmatpush1.msra.mxu0 0.0
      %637 = vmatprep.subr.mxu0 0.0
      %638 = vmatpush1.msra.mxu0 0.0
      %639 = vmatprep.subr.mxu0 0.0
      %640 = vmatpush1.msra.mxu0 0.0
      %641 = vmatprep.subr.mxu0 0.0
      %642 = vmatpush1.msra.mxu0 0.0
      %643 = vmatprep.subr.mxu0 0.0
      %644 = vmatpush1.msra.mxu0 0.0
      %645 = vmatprep.subr.mxu0 0.0
      %646 = vmatpush1.msra.mxu0 0.0
      %647 = vmatprep.subr.mxu0 0.0
      %648 = vmatpush1.msra.mxu0 0.0
      %649 = vmatprep.subr.mxu0 0.0
      %650 = vmatpush1.msra.mxu0 0.0
      %651 = vmatprep.subr.mxu0 0.0
      %652 = vmatpush1.msra.mxu0 0.0
      %653 = vmatprep.mubr.f32.mxu0 0.0
      %654 = vmatmul.mubr.f32.gmra.mrb[0].mxu0 %v542
      %v655 = vpop.f32.mrb[0].mxu0
      %v656 = vadd.f32 %v538, %v655
      %v657 = vpop.f32.mrb[0].mxu0
      %658 = vmatprep.mubr.f32.mxu0 0.0
      %659 = vmatmul.mubr.f32.gmra.mrb[0].mxu0 %v545
      %v660 = vpop.f32.mrb[0].mxu0
      %v661 = vadd.f32 %v538, %v660
      %v662 = vpop.f32.mrb[0].mxu0
      %663 = vmatprep.mubr.f32.mxu0 0.0
      %664 = vmatmul.mubr.f32.gmra.mrb[0].mxu0 %v548
      %v665 = vpop.f32.mrb[0].mxu0
      %v666 = vadd.f32 %v538, %v665
      %v667 = vpop.f32.mrb[0].mxu0
      %668 = vmatprep.mubr.f32.mxu0 0.0
      %669 = vmatmul.mubr.f32.gmra.mrb[0].mxu0 %v551
      %v670 = vpop.f32.mrb[0].mxu0
      %v671 = vadd.f32 %v538, %v670
      %v672 = vpop.f32.mrb[0].mxu0
      %673 = vmatprep.mubr.f32.mxu0 0.0
      %674 = vmatmul.mubr.f32.gmra.mrb[0].mxu0 %v554
      %v675 = vpop.f32.mrb[0].mxu0
      %v676 = vadd.f32 %v538, %v675
      %v677 = vpop.f32.mrb[0].mxu0
      %678 = vmatprep.mubr.f32.mxu0 0.0
      %679 = vmatmul.mubr.f32.gmra.mrb[0].mxu0 %v557
      %v680 = vpop.f32.mrb[0].mxu0
      %v681 = vadd.f32 %v538, %v680
      %v682 = vpop.f32.mrb[0].mxu0
      %683 = vmatprep.mubr.f32.mxu0 0.0
      %684 = vmatmul.mubr.f32.gmra.mrb[0].mxu0 %v560
      %v685 = vpop.f32.mrb[0].mxu0
      %v686 = vadd.f32 %v538, %v685
      %v687 = vpop.f32.mrb[0].mxu0
      %688 = vmatprep.mubr.f32.mxu0 0.0
      %689 = vmatmul.mubr.f32.gmra.mrb[0].mxu0 %v563
      %v690 = vpop.f32.mrb[0].mxu0
      %v691 = vadd.f32 %v538, %v690
      %v692 = vpop.f32.mrb[0].mxu0
      %693 = vmatprep.mubr.f32.mxu0 0.0
      %694 = vmatmul.mubr.f32.gmra.mrb[0].mxu0 %v566
      %v695 = vpop.f32.mrb[0].mxu0
      %v696 = vadd.f32 %v538, %v695
      %v697 = vpop.f32.mrb[0].mxu0
      %698 = vmatprep.mubr.f32.mxu0 0.0
      %699 = vmatmul.mubr.f32.gmra.mrb[0].mxu0 %v569
      %v700 = vpop.f32.mrb[0].mxu0
      %v701 = vadd.f32 %v538, %v700
      %v702 = vpop.f32.mrb[0].mxu0
      %703 = vmatprep.mubr.f32.mxu0 0.0
      %704 = vmatmul.mubr.f32.gmra.mrb[0].mxu0 %v572
      %v705 = vpop.f32.mrb[0].mxu0
      %v706 = vadd.f32 %v538, %v705
      %v707 = vpop.f32.mrb[0].mxu0
      %708 = vmatprep.mubr.f32.mxu0 0.0
      %709 = vmatmul.mubr.f32.gmra.mrb[0].mxu0 %v575
      %v710 = vpop.f32.mrb[0].mxu0
      %v711 = vadd.f32 %v538, %v710
      %v712 = vpop.f32.mrb[0].mxu0
      %713 = vmatprep.mubr.f32.mxu0 0.0
      %714 = vmatmul.mubr.f32.gmra.mrb[0].mxu0 %v578
      %v715 = vpop.f32.mrb[0].mxu0
      %v716 = vadd.f32 %v538, %v715
      %v717 = vpop.f32.mrb[0].mxu0
      %718 = vmatprep.mubr.f32.mxu0 0.0
      %719 = vmatmul.mubr.f32.gmra.mrb[0].mxu0 %v581
      %v720 = vpop.f32.mrb[0].mxu0
      %v721 = vadd.f32 %v538, %v720
      %v722 = vpop.f32.mrb[0].mxu0
      %723 = vmatprep.mubr.f32.mxu0 0.0
      %724 = vmatmul.mubr.f32.gmra.mrb[0].mxu0 %v584
      %v725 = vpop.f32.mrb[0].mxu0
      %v726 = vadd.f32 %v538, %v725
      %v727 = vpop.f32.mrb[0].mxu0
      %728 = vmatprep.mubr.f32.mxu0 0.0
      %729 = vmatmul.mubr.f32.gmra.mrb[0].mxu0 %v587
      %v730 = vpop.f32.mrb[0].mxu0
      %v731 = vadd.f32 %v538, %v730
      %v732 = vpop.f32.mrb[0].mxu0
      %733 = vdwg.mxu0
      %v734 = vmax.f32 %v656, 0.0
      %v735 = vmax.f32 %v661, 0.0
      %v736 = vmax.f32 %v666, 0.0
      %v737 = vmax.f32 %v671, 0.0
      %v738 = vmax.f32 %v676, 0.0
      %v739 = vmax.f32 %v681, 0.0
      %v740 = vmax.f32 %v686, 0.0
      %v741 = vmax.f32 %v691, 0.0
      %v742 = vmax.f32 %v696, 0.0
      %v743 = vmax.f32 %v701, 0.0
      %v744 = vmax.f32 %v706, 0.0
      %v745 = vmax.f32 %v711, 0.0
      %v746 = vmax.f32 %v716, 0.0
      %v747 = vmax.f32 %v721, 0.0
      %v748 = vmax.f32 %v726, 0.0
      %v749 = vmax.f32 %v731, 0.0
      %v751 = vlaneseq
      %v752 = vshrl.u32 %v751, 7
      %v753 = vsub.s32 0, %v752
      %v754 = vrot.slane %v317, %v753
      %v757 = vsel %vm540, %v734, 0
      %v760 = vsel %vm540, %v735, 0
      %v763 = vsel %vm540, %v736, 0
      %v766 = vsel %vm540, %v737, 0
      %v769 = vsel %vm540, %v738, 0
      %v772 = vsel %vm540, %v739, 0
      %v775 = vsel %vm540, %v740, 0
      %v778 = vsel %vm540, %v741, 0
      %v781 = vsel %vm540, %v742, 0
      %v784 = vsel %vm540, %v743, 0
      %v787 = vsel %vm540, %v744, 0
      %v790 = vsel %vm540, %v745, 0
      %v793 = vsel %vm540, %v746, 0
      %v796 = vsel %vm540, %v747, 0
      %v799 = vsel %vm540, %v748, 0
      %v802 = vsel %vm540, %v749, 0
      %804 = vmatprep.subr.mxu0 0.0
      %805 = vmatpush1.msra.mxu0 %v309
      %806 = vmatprep.subr.mxu0 0.0
      %807 = vmatpush1.msra.mxu0 %v310
      %808 = vmatprep.subr.mxu0 0.0
      %809 = vmatpush1.msra.mxu0 %v311
      %810 = vmatprep.subr.mxu0 0.0
      %811 = vmatpush1.msra.mxu0 %v312
      %812 = vmatprep.subr.mxu0 0.0
      %813 = vmatpush1.msra.mxu0 %v313
      %814 = vmatprep.subr.mxu0 0.0
      %815 = vmatpush1.msra.mxu0 %v314
      %816 = vmatprep.subr.mxu0 0.0
      %817 = vmatpush1.msra.mxu0 %v315
      %818 = vmatprep.subr.mxu0 0.0
      %819 = vmatpush1.msra.mxu0 %v316
      %820 = vmatprep.subr.mxu0 0.0
      %821 = vmatpush1.msra.mxu0 0.0
      %822 = vmatprep.subr.mxu0 0.0
      %823 = vmatpush1.msra.mxu0 0.0
      %824 = vmatprep.subr.mxu0 0.0
      %825 = vmatpush1.msra.mxu0 0.0
      %826 = vmatprep.subr.mxu0 0.0
      %827 = vmatpush1.msra.mxu0 0.0
      %828 = vmatprep.subr.mxu0 0.0
      %829 = vmatpush1.msra.mxu0 0.0
      %830 = vmatprep.subr.mxu0 0.0
      %831 = vmatpush1.msra.mxu0 0.0
      %832 = vmatprep.subr.mxu0 0.0
      %833 = vmatpush1.msra.mxu0 0.0
      %834 = vmatprep.subr.mxu0 0.0
      %835 = vmatpush1.msra.mxu0 0.0
      %836 = vmatprep.subr.mxu0 0.0
      %837 = vmatpush1.msra.mxu0 0.0
      %838 = vmatprep.subr.mxu0 0.0
      %839 = vmatpush1.msra.mxu0 0.0
      %840 = vmatprep.subr.mxu0 0.0
      %841 = vmatpush1.msra.mxu0 0.0
      %842 = vmatprep.subr.mxu0 0.0
      %843 = vmatpush1.msra.mxu0 0.0
      %844 = vmatprep.subr.mxu0 0.0
      %845 = vmatpush1.msra.mxu0 0.0
      %846 = vmatprep.subr.mxu0 0.0
      %847 = vmatpush1.msra.mxu0 0.0
      %848 = vmatprep.subr.mxu0 0.0
      %849 = vmatpush1.msra.mxu0 0.0
      %850 = vmatprep.subr.mxu0 0.0
      %851 = vmatpush1.msra.mxu0 0.0
      %852 = vmatprep.subr.mxu0 0.0
      %853 = vmatpush1.msra.mxu0 0.0
      %854 = vmatprep.subr.mxu0 0.0
      %855 = vmatpush1.msra.mxu0 0.0
      %856 = vmatprep.subr.mxu0 0.0
      %857 = vmatpush1.msra.mxu0 0.0
      %858 = vmatprep.subr.mxu0 0.0
      %859 = vmatpush1.msra.mxu0 0.0
      %860 = vmatprep.subr.mxu0 0.0
      %861 = vmatpush1.msra.mxu0 0.0
      %862 = vmatprep.subr.mxu0 0.0
      %863 = vmatpush1.msra.mxu0 0.0
      %864 = vmatprep.subr.mxu0 0.0
      %865 = vmatpush1.msra.mxu0 0.0
      %866 = vmatprep.subr.mxu0 0.0
      %867 = vmatpush1.msra.mxu0 0.0
      %868 = vmatprep.mubr.f32.mxu0 0.0
      %869 = vmatmul.mubr.f32.gmra.mrb[0].mxu0 %v757
      %v870 = vpop.f32.mrb[0].mxu0
      %v871 = vadd.f32 %v754, %v870
      %v872 = vpop.f32.mrb[0].mxu0
      %873 = vmatprep.mubr.f32.mxu0 0.0
      %874 = vmatmul.mubr.f32.gmra.mrb[0].mxu0 %v760
      %v875 = vpop.f32.mrb[0].mxu0
      %v876 = vadd.f32 %v754, %v875
      %v877 = vpop.f32.mrb[0].mxu0
      %878 = vmatprep.mubr.f32.mxu0 0.0
      %879 = vmatmul.mubr.f32.gmra.mrb[0].mxu0 %v763
      %v880 = vpop.f32.mrb[0].mxu0
      %v881 = vadd.f32 %v754, %v880
      %v882 = vpop.f32.mrb[0].mxu0
      %883 = vmatprep.mubr.f32.mxu0 0.0
      %884 = vmatmul.mubr.f32.gmra.mrb[0].mxu0 %v766
      %v885 = vpop.f32.mrb[0].mxu0
      %v886 = vadd.f32 %v754, %v885
      %v887 = vpop.f32.mrb[0].mxu0
      %888 = vmatprep.mubr.f32.mxu0 0.0
      %889 = vmatmul.mubr.f32.gmra.mrb[0].mxu0 %v769
      %v890 = vpop.f32.mrb[0].mxu0
      %v891 = vadd.f32 %v754, %v890
      %v892 = vpop.f32.mrb[0].mxu0
      %893 = vmatprep.mubr.f32.mxu0 0.0
      %894 = vmatmul.mubr.f32.gmra.mrb[0].mxu0 %v772
      %v895 = vpop.f32.mrb[0].mxu0
      %v896 = vadd.f32 %v754, %v895
      %v897 = vpop.f32.mrb[0].mxu0
      %898 = vmatprep.mubr.f32.mxu0 0.0
      %899 = vmatmul.mubr.f32.gmra.mrb[0].mxu0 %v775
      %v900 = vpop.f32.mrb[0].mxu0
      %v901 = vadd.f32 %v754, %v900
      %v902 = vpop.f32.mrb[0].mxu0
      %903 = vmatprep.mubr.f32.mxu0 0.0
      %904 = vmatmul.mubr.f32.gmra.mrb[0].mxu0 %v778
      %v905 = vpop.f32.mrb[0].mxu0
      %v906 = vadd.f32 %v754, %v905
      %v907 = vpop.f32.mrb[0].mxu0
      %908 = vmatprep.mubr.f32.mxu0 0.0
      %909 = vmatmul.mubr.f32.gmra.mrb[0].mxu0 %v781
      %v910 = vpop.f32.mrb[0].mxu0
      %v911 = vadd.f32 %v754, %v910
      %v912 = vpop.f32.mrb[0].mxu0
      %913 = vmatprep.mubr.f32.mxu0 0.0
      %914 = vmatmul.mubr.f32.gmra.mrb[0].mxu0 %v784
      %v915 = vpop.f32.mrb[0].mxu0
      %v916 = vadd.f32 %v754, %v915
      %v917 = vpop.f32.mrb[0].mxu0
      %918 = vmatprep.mubr.f32.mxu0 0.0
      %919 = vmatmul.mubr.f32.gmra.mrb[0].mxu0 %v787
      %v920 = vpop.f32.mrb[0].mxu0
      %v921 = vadd.f32 %v754, %v920
      %v922 = vpop.f32.mrb[0].mxu0
      %923 = vmatprep.mubr.f32.mxu0 0.0
      %924 = vmatmul.mubr.f32.gmra.mrb[0].mxu0 %v790
      %v925 = vpop.f32.mrb[0].mxu0
      %v926 = vadd.f32 %v754, %v925
      %v927 = vpop.f32.mrb[0].mxu0
      %928 = vmatprep.mubr.f32.mxu0 0.0
      %929 = vmatmul.mubr.f32.gmra.mrb[0].mxu0 %v793
      %v930 = vpop.f32.mrb[0].mxu0
      %v931 = vadd.f32 %v754, %v930
      %v932 = vpop.f32.mrb[0].mxu0
      %933 = vmatprep.mubr.f32.mxu0 0.0
      %934 = vmatmul.mubr.f32.gmra.mrb[0].mxu0 %v796
      %v935 = vpop.f32.mrb[0].mxu0
      %v936 = vadd.f32 %v754, %v935
      %v937 = vpop.f32.mrb[0].mxu0
      %938 = vmatprep.mubr.f32.mxu0 0.0
      %939 = vmatmul.mubr.f32.gmra.mrb[0].mxu0 %v799
      %v940 = vpop.f32.mrb[0].mxu0
      %v941 = vadd.f32 %v754, %v940
      %v942 = vpop.f32.mrb[0].mxu0
      %943 = vmatprep.mubr.f32.mxu0 0.0
      %944 = vmatmul.mubr.f32.gmra.mrb[0].mxu0 %v802
      %v945 = vpop.f32.mrb[0].mxu0
      %v946 = vadd.f32 %v754, %v945
      %v947 = vpop.f32.mrb[0].mxu0
      %948 = vdwg.mxu0
      %949 = vst [vmem:[%s280] sm:$0xff] %v871
      %950 = vst [vmem:[%s280 + $0x8] sm:$0xff] %v876
      %951 = vst [vmem:[%s280 + $0x10] sm:$0xff] %v881
      %952 = vst [vmem:[%s280 + $0x18] sm:$0xff] %v886
      %953 = vst [vmem:[%s280 + $0x20] sm:$0xff] %v891
      %954 = vst [vmem:[%s280 + $0x28] sm:$0xff] %v896
      %955 = vst [vmem:[%s280 + $0x30] sm:$0xff] %v901
      %956 = vst [vmem:[%s280 + $0x38] sm:$0xff] %v906
      %957 = vst [vmem:[%s280 + $0x40] sm:$0xff] %v911
      %958 = vst [vmem:[%s280 + $0x48] sm:$0xff] %v916
      %959 = vst [vmem:[%s280 + $0x50] sm:$0xff] %v921
      %960 = vst [vmem:[%s280 + $0x58] sm:$0xff] %v926
      %961 = vst [vmem:[%s280 + $0x60] sm:$0xff] %v931
      %962 = vst [vmem:[%s280 + $0x68] sm:$0xff] %v936
      %963 = vst [vmem:[%s280 + $0x70] sm:$0xff] %v941
      %964 = vst [vmem:[%s280 + $0x78] sm:$0xff] %v946
      %s965 = smul.u32 16, %s18
      %p966 = scmp.lt.s32.totalorder %s965, 31
      %s967 = scalar_select %p966, %s965, 31
      %s968 = smul.addr %s967, 8
      %s969 = scalar_lea.vmem %s7, %s968
      // Predicated region
      $region49: #{dqn_forward.1} parent=47 // pred_check
        %p970 = pneg %p188
      $region50: #{dqn_forward.1} parent=47 // pred_check_branch
        %972 = sbr.rel (%p970) target = $region52
      $region51: #{dqn_forward.1} parent=47 // pred_region
        %s973 = smul.u32 16, %s18
      $region52: #{dqn_forward.1} parent=47 // pred_fallthru
        _
    $region48: #{dqn_forward.1} parent=5 // pred_fallthru
      _
    %p974 = scmp.le.s32.totalorder 2, %s13
    // Predicated region
    $region53: #{dqn_forward.1} parent=5 // pred_check
      %p975 = pneg %p974
    $region54: #{dqn_forward.1} parent=5 // pred_check_branch
      %977 = sbr.rel (%p975) target = $region56
    $region55: #{dqn_forward.1} parent=5 // pred_region
      %s978 = ssub.s32 %s13, 2
      // Predicated region
      $region57: #{dqn_forward.1} parent=55 // pred_check
        %p979 = pneg %p194
      $region58: #{dqn_forward.1} parent=55 // pred_check_branch
        %981 = sbr.rel (%p979) target = $region60
      $region59: #{dqn_forward.1} parent=55 // pred_region
        %s982 = smul.u32 16, %s19
        %p983 = scmp.lt.s32.totalorder %s982, 31
        %s984 = scalar_select %p983, %s982, 31
        %s985 = smul.addr %s984, 8
        %s986 = scalar_lea.vmem %s7, %s985
      $region60: #{dqn_forward.1} parent=55 // pred_fallthru
        _
    $region56: #{dqn_forward.1} parent=5 // pred_fallthru
      _
  $region6: #{dqn_forward.1} parent=0 // loop_footer
    %s17 = sadd.s32 1, %s13
  $region7: #{dqn_forward.1} parent=0 // loop_footer_branch
    %12 = sbr.rel target = $region3
  $region8: #{dqn_forward.1} parent=0 // loop_exit
    _

</llo_original>
